<compile_context>
chip_gen: v7x
topology: tpu7x:2x2x1
jax: 0.10.0
libtpu: 0.0.40
codegen_flags: <defaults>
</compile_context>

<pallas_src>
import functools

import jax
import jax.numpy as jnp
from jax import lax
from jax.experimental import pallas as pl
from jax.experimental.pallas import tpu as pltpu


# ---------------------------------------------------------------------------
# helpers
# ---------------------------------------------------------------------------
def _round_up(x, m):
    return (x + m - 1) // m * m


def _pad_rows(a, n_rows):
    if a.shape[0] == n_rows:
        return a
    pad = [(0, n_rows - a.shape[0])] + [(0, 0)] * (a.ndim - 1)
    return jnp.pad(a, pad)


_VMEM_LIMIT = None


def _vmem_limit_bytes():
    """Explicit scoped-VMEM budget (v7x has 64 MiB physical, v5e/v6e 128 MiB)."""
    global _VMEM_LIMIT
    if _VMEM_LIMIT is None:
        try:
            cap = int(pltpu.get_tpu_info().vmem_capacity_bytes)
            _VMEM_LIMIT = cap * 3 // 4
        except Exception:
            _VMEM_LIMIT = 48 * 1024 * 1024
    return _VMEM_LIMIT


def _compiler_params():
    return pltpu.CompilerParams(dimension_semantics=("parallel",),
                                vmem_limit_bytes=_vmem_limit_bytes())


_SINGLE_BUFFER_OK = True


def _call_with_fallback(fn):
    """fn(single_buffer) builds specs and runs the pallas_call.  Try Buffered(1) on
    constant operands first; if the installed JAX/Mosaic rejects it, fall back to the
    default double-buffering (and remember the failure)."""
    global _SINGLE_BUFFER_OK
    if _SINGLE_BUFFER_OK:
        try:
            return fn(True)
        except Exception:
            _SINGLE_BUFFER_OK = False
    return fn(False)


def _const_spec(shape, single_buffer):
    """BlockSpec for a grid-invariant (VMEM-resident) operand."""
    index_map = lambda i: (0,) * len(shape)
    if single_buffer:
        return pl.BlockSpec(shape, index_map, pipeline_mode=pl.Buffered(1))
    return pl.BlockSpec(shape, index_map)


def _bytes_accessed(operands, out_shape, out_dtype):
    b = sum(int(a.size) * a.dtype.itemsize for a in operands)
    b += int(out_shape[0]) * int(out_shape[1]) * jnp.dtype(out_dtype).itemsize
    return int(b)


# ---------------------------------------------------------------------------
# Coarse-level matmul kernel: xw = x @ w   (hoisted feature term of a stage)
# ---------------------------------------------------------------------------
def _matmul_kernel(x_ref, w_ref, o_ref, *, compute_dtype):
    o_ref[...] = jnp.dot(x_ref[...].astype(compute_dtype), w_ref[...],
                         preferred_element_type=jnp.float32).astype(o_ref.dtype)


def coarse_matmul_pallas(x, w, *, out_dtype=jnp.bfloat16,
                         compute_dtype=jnp.bfloat16, block_rows=512):
    """x @ w at coarse resolution.  Returns a row-padded (multiple of the row tile)
    result; the extra rows are zeros and are never gathered by valid indices."""
    n, k = x.shape
    c = w.shape[1]
    tm = min(_round_up(block_rows, 128), _round_up(n, 128))
    n_pad = _round_up(n, tm)
    x = _pad_rows(x, n_pad)
    cost = pl.CostEstimate(flops=int(2 * n_pad * k * c), transcendentals=0,
                           bytes_accessed=_bytes_accessed([x, w], (n_pad, c), out_dtype))

    def run(single_buffer):
        return pl.pallas_call(
            functools.partial(_matmul_kernel, compute_dtype=compute_dtype),
            out_shape=jax.ShapeDtypeStruct((n_pad, c), out_dtype),
            grid=(n_pad // tm,),
            in_specs=[pl.BlockSpec((tm, k), lambda i: (i, 0)),
                      _const_spec((k, c), single_buffer)],
            out_specs=pl.BlockSpec((tm, c), lambda i: (i, 0)),
            compiler_params=_compiler_params(),
            cost_estimate=cost,
        )(x, w)

    return _call_with_fallback(run)


# ---------------------------------------------------------------------------
# Fused decoder-stage kernel:
#   gather case : out = act( onehot(idx) @ xw + skip @ w_skip + beta )
#   plain case  : out = act( x @ w_feat     + skip @ w_skip + beta )
# ---------------------------------------------------------------------------
def _fused_stage_kernel(*refs, has_gather, has_skip, relu, negative_slope,
                        compute_dtype):
    it = iter(refs)
    if has_gather:
        idx_ref = next(it)        # (tm, 1) int32
        xw_ref = next(it)         # (n_src_pad, c_out) resident, = x @ w_feat
    else:
        x_ref = next(it)          # (tm, c_x)
    skip_ref = next(it) if has_skip else None
    wf_ref = None if has_gather else next(it)
    ws_ref = next(it) if has_skip else None
    beta_ref = next(it)
    o_ref = next(it)

    if has_gather:
        # NearestUpsample fused as a one-hot MXU gather: the row permutation runs on
        # the MXU (under-used in these low-K stages) instead of the scalar/XLU
        # dynamic-addressing path of jnp.take.
        tm = idx_ref.shape[0]
        n_src = xw_ref.shape[0]
        lane_ids = lax.broadcasted_iota(jnp.int32, (tm, n_src), 1)
        onehot = (idx_ref[...] == lane_ids).astype(xw_ref.dtype)
        acc = jnp.dot(onehot, xw_ref[...], preferred_element_type=jnp.float32)
    else:
        acc = jnp.dot(x_ref[...].astype(compute_dtype), wf_ref[...],
                      preferred_element_type=jnp.float32)

    if has_skip:
        # Channel concat fused via weight split: one extra MXU dot into the same
        # f32 accumulator; skip is streamed in its native dtype and cast per-tile.
        acc = acc + jnp.dot(skip_ref[...].astype(compute_dtype), ws_ref[...],
                            preferred_element_type=jnp.float32)

    y = acc + beta_ref[...]                 # BN shift (gamma already folded into W)
    if relu:
        y = jnp.where(y >= 0.0, y, negative_slope * y)
    o_ref[...] = y.astype(o_ref.dtype)


def fused_unary_stage_pallas(x, idx, skip, w_feat, w_skip, beta, *, relu,
                             negative_slope=0.1, out_dtype=jnp.bfloat16,
                             compute_dtype=jnp.bfloat16, block_rows=512):
    """One fused KPFCNN decoder stage:

        out = act( gather(x, idx) @ w_feat + skip @ w_skip + beta )

    When a gather is requested, x @ w_feat is hoisted to the coarse level (small
    separate Pallas matmul) and the row-tiled kernel gathers the precomputed rows
    with a one-hot MXU dot.  The 1-D row grid is marked "parallel" (pipelined /
    megacore-shardable); row tiles are multiples of 128 so all stores are lane-dense.
    """
    has_gather = idx is not None
    has_skip = skip is not None

    n_src, c_x = x.shape
    c_out = w_feat.shape[1]
    if w_feat.shape[0] != c_x:
        raise ValueError("w_feat rows must match x channels")
    n_out = int(idx.shape[0]) if has_gather else n_src
    if has_skip and skip.shape[0] != n_out:
        raise ValueError("skip rows must match the output point count")

    tm = min(_round_up(block_rows, 128), _round_up(n_out, 128))
    n_pad = _round_up(n_out, tm)
    grid = (n_pad // tm,)

    beta = jnp.asarray(beta, jnp.float32).reshape(1, c_out)

    operands = []
    flops = 0
    if has_gather:
        # Hoist: gather(x, idx) @ W == gather(x @ W, idx); xw is bf16 and resident.
        xw = coarse_matmul_pallas(x, w_feat, out_dtype=compute_dtype,
                                  compute_dtype=compute_dtype, block_rows=block_rows)
        idx2d = _pad_rows(idx.astype(jnp.int32).reshape(-1, 1), n_pad)
        operands.append(idx2d)
        operands.append(xw)
        flops += 2 * n_pad * xw.shape[0] * c_out
    else:
        operands.append(_pad_rows(x, n_pad))
        flops += 2 * n_pad * c_x * c_out
    if has_skip:
        operands.append(_pad_rows(skip, n_pad))
        flops += 2 * n_pad * skip.shape[1] * c_out
    if not has_gather:
        operands.append(w_feat)
    if has_skip:
        operands.append(w_skip)
    operands.append(beta)

    kernel = functools.partial(
        _fused_stage_kernel, has_gather=has_gather, has_skip=has_skip,
        relu=relu, negative_slope=negative_slope, compute_dtype=compute_dtype)
    cost = pl.CostEstimate(flops=int(flops), transcendentals=0,
                           bytes_accessed=_bytes_accessed(operands, (n_pad, c_out),
                                                          out_dtype))

    def run(single_buffer):
        in_specs = []
        if has_gather:
            in_specs.append(pl.BlockSpec((tm, 1), lambda i: (i, 0)))
            in_specs.append(_const_spec(operands[1].shape, single_buffer))
        else:
            in_specs.append(pl.BlockSpec((tm, c_x), lambda i: (i, 0)))
        if has_skip:
            in_specs.append(pl.BlockSpec((tm, skip.shape[1]), lambda i: (i, 0)))
        if not has_gather:
            in_specs.append(_const_spec(w_feat.shape, single_buffer))
        if has_skip:
            in_specs.append(_const_spec(w_skip.shape, single_buffer))
        in_specs.append(_const_spec((1, c_out), single_buffer))
        return pl.pallas_call(
            kernel,
            out_shape=jax.ShapeDtypeStruct((n_pad, c_out), out_dtype),
            grid=grid,
            in_specs=in_specs,
            out_specs=pl.BlockSpec((tm, c_out), lambda i: (i, 0)),
            compiler_params=_compiler_params(),
            cost_estimate=cost,
        )(*operands)

    out = _call_with_fallback(run)
    return out[:n_out] if n_pad != n_out else out


# ---------------------------------------------------------------------------
# Standalone nearest-neighbour upsample (one-hot MXU gather, row-tiled output).
# Inside KPDecoder the gather is normally fused into the following UnaryBlock;
# this kernel is only used when a feature-pyramid output must be materialized.
# ---------------------------------------------------------------------------
def _upsample_kernel(idx_ref, x_ref, o_ref):
    tm = idx_ref.shape[0]
    n_src = x_ref.shape[0]
    lane_ids = lax.broadcasted_iota(jnp.int32, (tm, n_src), 1)
    onehot = (idx_ref[...] == lane_ids).astype(x_ref.dtype)
    o_ref[...] = jnp.dot(onehot, x_ref[...],
                         preferred_element_type=jnp.float32).astype(o_ref.dtype)


def nearest_upsample_pallas(x, idx, *, block_rows=512):
    n_in, c = x.shape
    n_out = int(idx.shape[0])
    tm = min(_round_up(block_rows, 128), _round_up(n_out, 128))
    n_pad = _round_up(n_out, tm)
    idx2d = _pad_rows(idx.astype(jnp.int32).reshape(-1, 1), n_pad)
    cost = pl.CostEstimate(flops=int(2 * n_pad * n_in * c), transcendentals=0,
                           bytes_accessed=_bytes_accessed([idx2d, x], (n_pad, c),
                                                          x.dtype))

    def run(single_buffer):
        return pl.pallas_call(
            _upsample_kernel,
            out_shape=jax.ShapeDtypeStruct((n_pad, c), x.dtype),
            grid=(n_pad // tm,),
            in_specs=[pl.BlockSpec((tm, 1), lambda i: (i, 0)),
                      _const_spec((n_in, c), single_buffer)],
            out_specs=pl.BlockSpec((tm, c), lambda i: (i, 0)),
            compiler_params=_compiler_params(),
            cost_estimate=cost,
        )(idx2d, x)

    out = _call_with_fallback(run)
    return out[:n_out] if n_pad != n_out else out


# ---------------------------------------------------------------------------
# Decoder block wrappers mirroring the PyTorch modules
# ---------------------------------------------------------------------------
class NearestUpsampleBlock:
    def __init__(self, layer_ind):
        self.layer_ind = layer_ind

    def __call__(self, feats, data_dict):
        return nearest_upsample_pallas(feats, data_dict["upsamples"][self.layer_ind])


class UnaryBlock:
    """Linear (no bias) + folded BatchNorm + optional LeakyReLU(0.1).

    gamma is folded into the weight offline (W' = W * gamma); the output channel dim
    is zero-padded to a multiple of `lane_multiple` so stores are lane-dense; weights
    are stored in bf16 for native MXU rate with f32 accumulation in-kernel."""

    def __init__(self, w, gamma, beta, relu=True, *, negative_slope=0.1,
                 compute_dtype=jnp.bfloat16, lane_multiple=128):
        w = jnp.asarray(w, jnp.float32)
        gamma = jnp.asarray(gamma, jnp.float32).reshape(1, -1)
        beta = jnp.asarray(beta, jnp.float32).reshape(1, -1)
        self.in_channels = int(w.shape[0])
        self.out_channels = int(w.shape[1])
        c_pad = _round_up(self.out_channels, lane_multiple)
        w = w * gamma                                            # fold BN scale
        self.w = jnp.pad(w, ((0, 0), (0, c_pad - self.out_channels))).astype(compute_dtype)
        self.beta = jnp.pad(beta, ((0, 0), (0, c_pad - self.out_channels)))
        self.relu = relu
        self.negative_slope = negative_slope
        self.compute_dtype = compute_dtype

    def fused(self, x, idx=None, skip=None, *, out_dtype=None, block_rows=512):
        """Apply gather(x, idx) [optional], channel-concat with skip [optional] and
        the unary layer as a fused Pallas stage (feature matmul hoisted to coarse
        level when a gather is present)."""
        if out_dtype is None:
            out_dtype = self.compute_dtype
        c_skip = skip.shape[1] if skip is not None else 0
        c_feat_true = self.in_channels - c_skip
        if c_feat_true < 0:
            raise ValueError("skip has more channels than the unary layer expects")
        w_feat = self.w[:c_feat_true]
        w_skip = self.w[c_feat_true:self.in_channels] if skip is not None else None
        if x.shape[1] < c_feat_true:
            raise ValueError("input has fewer channels than the unary layer expects")
        if x.shape[1] > c_feat_true:
            # Input carries lane padding from a previous stage: extend W with zero
            # rows so the padded channels contribute nothing (lazy pad-strip).
            w_feat = jnp.pad(w_feat, ((0, x.shape[1] - c_feat_true), (0, 0)))
        return fused_unary_stage_pallas(
            x, idx, skip, w_feat, w_skip, self.beta,
            relu=self.relu, negative_slope=self.negative_slope,
            out_dtype=out_dtype, compute_dtype=self.compute_dtype,
            block_rows=block_rows)

    def __call__(self, feats, data_dict=None):
        return self.fused(feats)


class KPDecoder:
    """JAX/Pallas port of vision3d KPDecoder.forward.

    NearestUpsample -> concat -> UnaryBlock sequences are fused into one Pallas stage
    (plus a tiny coarse-level matmul); neither the upsampled nor the concatenated
    intermediate tensors are ever materialized in HBM.  Intermediate stage outputs
    are bf16; only the final stage emits `final_dtype`."""

    def __init__(self, decoder_dict, feature_pyramid=False,
                 compute_dtype=jnp.bfloat16, final_dtype=jnp.float32):
        self.decoder_blocks = list(decoder_dict["decoder_blocks"])
        self.decoder_concats = decoder_dict["decoder_concats"]
        self.decoder_outputs = decoder_dict["decoder_outputs"]
        self.feature_pyramid = feature_pyramid
        self.compute_dtype = compute_dtype
        self.final_dtype = final_dtype
        unary_ids = [i for i, b in enumerate(self.decoder_blocks)
                     if isinstance(b, UnaryBlock)]
        self._last_unary = unary_ids[-1] if unary_ids else -1

    def __call__(self, feats, skip_feats, data_dict):
        # NOTE: skips are deliberately NOT pre-cast to bf16 here: a standalone cast
        # pass costs read-f32 + write-bf16 + read-bf16 (8 B/elem) vs 4 B/elem when
        # streaming f32 directly and casting per-tile inside the kernel.
        feature_pyramid = []
        skip_layer_id = len(skip_feats) - 1

        pending_idx = None               # deferred nearest-upsample indices
        pending_skip = None              # deferred skip-feature concat
        true_channels = feats.shape[1]   # valid channels of `feats` (rest = lane pad)

        def materialize(f):
            if f.shape[1] != true_channels:
                f = f[:, :true_channels]
            if pending_idx is not None:
                f = nearest_upsample_pallas(f, pending_idx)
            if pending_skip is not None:
                f = jnp.concatenate([f, pending_skip.astype(f.dtype)], axis=1)
            return f

        for block_i, block_op in enumerate(self.decoder_blocks):
            if block_i in self.decoder_outputs:
                feature_pyramid.append(materialize(feats))
            if block_i in self.decoder_concats:
                if pending_skip is not None:       # two concats with no unary between
                    feats = materialize(feats)
                    true_channels = feats.shape[1]
                    pending_idx = None
                    pending_skip = None
                pending_skip = skip_feats[skip_layer_id]
                skip_layer_id -= 1
            if isinstance(block_op, NearestUpsampleBlock):
                if pending_idx is not None or pending_skip is not None:
                    feats = materialize(feats)
                    true_channels = feats.shape[1]
                    pending_idx = None
                    pending_skip = None
                pending_idx = data_dict["upsamples"][block_op.layer_ind]
            elif isinstance(block_op, UnaryBlock):
                out_dtype = (self.final_dtype if block_i == self._last_unary
                             else self.compute_dtype)
                feats = block_op.fused(feats, pending_idx, pending_skip,
                                       out_dtype=out_dtype)
                true_channels = block_op.out_channels
                pending_idx = None
                pending_skip = None
            else:
                feats = block_op(materialize(feats), data_dict)
                true_channels = feats.shape[1]
                pending_idx = None
                pending_skip = None

        feats = materialize(feats)
        feature_pyramid.append(feats)
        if self.feature_pyramid:
            feature_pyramid.reverse()
            return feature_pyramid
        return feats


# ---------------------------------------------------------------------------
# Pure-JAX f32 reference (for correctness check)
# ---------------------------------------------------------------------------
def _ref_decoder(feats, skip_feats, data_dict, params):
    def unary(x, w, g, b, relu):
        y = x @ w * g + b
        return jnp.where(y >= 0, y, 0.1 * y) if relu else y

    # block 0: upsample level2 -> level1
    x = feats[data_dict["upsamples"][1]]
    # block 1: concat skip[1], unary0
    x = jnp.concatenate([x, skip_feats[1]], axis=1)
    x = unary(x, params["w0"], params["g0"], params["b0"], relu=True)
    # block 2: upsample level1 -> level0
    x = x[data_dict["upsamples"][0]]
    # block 3: concat skip[0], last unary (no relu)
    x = jnp.concatenate([x, skip_feats[0]], axis=1)
    x = unary(x, params["w1"], params["g1"], params["b1"], relu=False)
    return x


# ---------------------------------------------------------------------------
# Main
# ---------------------------------------------------------------------------
if __name__ == "__main__":
    # Three pyramid levels: level0 (finest) .. level2 (coarsest).
    n0, n1, n2 = 32, 16, 8       # points per level
    c0, c1, c2 = 8, 16, 32       # channels per level

    key = jax.random.PRNGKey(0)
    keys = jax.random.split(key, 12)

    feats = jax.random.normal(keys[0], (n2, c2), dtype=jnp.float32)          # coarsest feats
    skip_feats = [
        jax.random.normal(keys[1], (n0, c0), dtype=jnp.float32),             # level-0 skip
        jax.random.normal(keys[2], (n1, c1), dtype=jnp.float32),             # level-1 skip
    ]
    data_dict = {
        "upsamples": [
            jax.random.randint(keys[3], (n0,), 0, n1, dtype=jnp.int32),      # level0 -> level1 nn
            jax.random.randint(keys[4], (n1,), 0, n2, dtype=jnp.int32),      # level1 -> level2 nn
        ]
    }

    # Deterministic synthetic parameters (Linear weight + folded-BN scale/shift).
    w0 = jax.random.normal(keys[5], (c2 + c1, c1), dtype=jnp.float32) * 0.1  # (48, 16)
    g0 = jax.random.normal(keys[6], (1, c1), dtype=jnp.float32) * 0.1 + 1.0
    b0 = jax.random.normal(keys[7], (1, c1), dtype=jnp.float32) * 0.1
    w1 = jax.random.normal(keys[8], (c1 + c0, c0), dtype=jnp.float32) * 0.1  # (24, 8)
    g1 = jax.random.normal(keys[9], (1, c0), dtype=jnp.float32) * 0.1 + 1.0
    b1 = jax.random.normal(keys[10], (1, c0), dtype=jnp.float32) * 0.1
    params = dict(w0=w0, g0=g0, b0=b0, w1=w1, g1=g1, b1=b1)

    decoder_dict = {
        "decoder_blocks": [
            NearestUpsampleBlock(layer_ind=1),
            UnaryBlock(w0, g0, b0, relu=True),
            NearestUpsampleBlock(layer_ind=0),
            UnaryBlock(w1, g1, b1, relu=False),   # last_unary: no activation
        ],
        "decoder_concats": [1, 3],
        "decoder_outputs": [],
    }

    decoder = KPDecoder(decoder_dict, feature_pyramid=False)
    out = decoder(feats, skip_feats, data_dict)
    out = jax.block_until_ready(out)

    ref = _ref_decoder(feats, skip_feats, data_dict, params)
    assert out.shape == (n0, c0), out.shape
    assert out.dtype == jnp.float32, out.dtype
    # bf16 MXU compute + bf16 intermediate stage outputs: compare against the f32
    # reference with a correspondingly looser tolerance.
    assert jnp.allclose(out, ref, atol=5e-2, rtol=5e-2), "mismatch vs reference"

    print("KERNEL_OK")
</pallas_src>

<mosaic_0001>
module attributes {stable_mosaic.version = 11 : i64} {
  func.func @_matmul_kernel(%arg0: i32, %arg1: memref<128x32xf32, #tpu.memory_space<vmem>>, %arg2: memref<32x128xbf16, #tpu.memory_space<vmem>>, %arg3: memref<128x128xbf16, #tpu.memory_space<vmem>>) attributes {dimension_semantics = [#tpu.dimension_semantics<parallel>], iteration_bounds = array<i64: 1>, scalar_prefetch = 0 : i64, scratch_operands = 0 : i64, tpu.core_type = #tpu.core_type<tc>, window_params = [{transform_indices = @transform_0, window_bounds = array<i64: 128, 32>}, {pipeline_mode = #tpu.pipeline_mode<synchronous>, transform_indices = @transform_1, window_bounds = array<i64: 32, 128>}, {transform_indices = @transform_2, window_bounds = array<i64: 128, 128>}]} {
    %c0 = arith.constant 0 : index
    %c0_0 = arith.constant 0 : index
    %0 = vector.load %arg1[%c0, %c0_0] : memref<128x32xf32, #tpu.memory_space<vmem>>, vector<128x32xf32>
    %1 = arith.truncf %0 : vector<128x32xf32> to vector<128x32xbf16>
    %c0_1 = arith.constant 0 : index
    %c0_2 = arith.constant 0 : index
    %2 = vector.load %arg2[%c0_1, %c0_2] : memref<32x128xbf16, #tpu.memory_space<vmem>>, vector<32x128xbf16>
    %cst = arith.constant dense<0.000000e+00> : vector<128x128xf32>
    %3 = tpu.matmul %1, %2, %cst {dimension_numbers = #tpu.dot_dimension_numbers<[1], [0], [0], [1], [0, 0, 1, 1], [], []>} : vector<128x32xbf16>, vector<32x128xbf16>, vector<128x128xf32> -> vector<128x128xf32>
    %4 = arith.truncf %3 : vector<128x128xf32> to vector<128x128xbf16>
    %c0_3 = arith.constant 0 : index
    %c0_4 = arith.constant 0 : index
    %5 = vector.load %arg3[%c0_3, %c0_4] : memref<128x128xbf16, #tpu.memory_space<vmem>>, vector<128x128xbf16>
    tpu.vector_store %arg3[%c0_3, %c0_4], %4 {strides = array<i32>} : memref<128x128xbf16, #tpu.memory_space<vmem>>, vector<128x128xbf16>,
    return
  }
  func.func @transform_0(%arg0: i32) -> (i32, i32) {
    %c0_i32 = arith.constant 0 : i32
    %c0_i32_0 = arith.constant 0 : i32
    return %arg0, %c0_i32 : i32, i32
  }
  func.func @transform_1(%arg0: i32) -> (i32, i32) {
    %c0_i32 = arith.constant 0 : i32
    %c0_i32_0 = arith.constant 0 : i32
    %c0_i32_1 = arith.constant 0 : i32
    return %c0_i32, %c0_i32_0 : i32, i32
  }
  func.func @transform_2(%arg0: i32) -> (i32, i32) {
    %c0_i32 = arith.constant 0 : i32
    %c0_i32_0 = arith.constant 0 : i32
    return %arg0, %c0_i32 : i32, i32
  }
}

module attributes {stable_mosaic.version = 11 : i64} {
  func.func @_matmul_kernel(%arg0: i32, %arg1: memref<128x32xf32, #tpu.memory_space<vmem>>, %arg2: memref<32x128xbf16, #tpu.memory_space<vmem>>, %arg3: memref<128x128xbf16, #tpu.memory_space<vmem>>) attributes {dimension_semantics = [#tpu.dimension_semantics<parallel>], iteration_bounds = array<i64: 1>, scalar_prefetch = 0 : i64, scratch_operands = 0 : i64, tpu.core_type = #tpu.core_type<tc>, window_params = [{transform_indices = @transform_0, window_bounds = array<i64: 128, 32>}, {pipeline_mode = #tpu.pipeline_mode<synchronous>, transform_indices = @transform_1, window_bounds = array<i64: 32, 128>}, {transform_indices = @transform_2, window_bounds = array<i64: 128, 128>}]} {
    %c0 = arith.constant 0 : index
    %c0_0 = arith.constant 0 : index
    %0 = vector.load %arg1[%c0, %c0_0] : memref<128x32xf32, #tpu.memory_space<vmem>>, vector<128x32xf32>
    %1 = arith.truncf %0 : vector<128x32xf32> to vector<128x32xbf16>
    %c0_1 = arith.constant 0 : index
    %c0_2 = arith.constant 0 : index
    %2 = vector.load %arg2[%c0_1, %c0_2] : memref<32x128xbf16, #tpu.memory_space<vmem>>, vector<32x128xbf16>
    %cst = arith.constant dense<0.000000e+00> : vector<128x128xf32>
    %3 = tpu.matmul %1, %2, %cst {dimension_numbers = #tpu.dot_dimension_numbers<[1], [0], [0], [1], [0, 0, 1, 1], [], []>} : vector<128x32xbf16>, vector<32x128xbf16>, vector<128x128xf32> -> vector<128x128xf32>
    %4 = arith.truncf %3 : vector<128x128xf32> to vector<128x128xbf16>
    %c0_3 = arith.constant 0 : index
    %c0_4 = arith.constant 0 : index
    %5 = vector.load %arg3[%c0_3, %c0_4] : memref<128x128xbf16, #tpu.memory_space<vmem>>, vector<128x128xbf16>
    tpu.vector_store %arg3[%c0_3, %c0_4], %4 {strides = array<i32>} : memref<128x128xbf16, #tpu.memory_space<vmem>>, vector<128x128xbf16>,
    return
  }
  func.func @transform_0(%arg0: i32) -> (i32, i32) {
    %c0_i32 = arith.constant 0 : i32
    %c0_i32_0 = arith.constant 0 : i32
    return %arg0, %c0_i32 : i32, i32
  }
  func.func @transform_1(%arg0: i32) -> (i32, i32) {
    %c0_i32 = arith.constant 0 : i32
    %c0_i32_0 = arith.constant 0 : i32
    %c0_i32_1 = arith.constant 0 : i32
    return %c0_i32, %c0_i32_0 : i32, i32
  }
  func.func @transform_2(%arg0: i32) -> (i32, i32) {
    %c0_i32 = arith.constant 0 : i32
    %c0_i32_0 = arith.constant 0 : i32
    return %arg0, %c0_i32 : i32, i32
  }
}

</mosaic_0001>

<llo_original>
// kernel: tpu_custom_call.1
$region0: #{tpu_custom_call.1}
  #allocation0 [shape = 'u32[]', space=smem, size = 0x4, offset = 0x4, fixed_abs, tag = 'smem constant byte address 0x4 - core index']
  #allocation1 [shape = 'u32[144,128]{1,0:T(1,128)}', space=vmem, size = 0x12000, scoped, tag = 'internal scratch']
  %s0 = inlined_call_operand.vmem [shape: f32[128,32], index: 0, kind: input, shape index: {}]
  %s1 = inlined_call_operand.vmem [shape: bf16[32,128], index: 1, kind: input, shape index: {}]
  %s2 = inlined_call_operand.hbm [shape: bf16[128,128], index: 2, kind: output, shape index: {}]
  %s3 = sld [smem:[#allocation0]]
  $region18: #{tpu_custom_call.1} parent=0
    _
  %s5 = ssub.s32 1, %s3
  %s6 = scalar_select 0, %s5, %s3
  $region1: #{tpu_custom_call.1} parent=0
    #allocation2 [shape = 'u8[32768]{0}', space=vmem, size = 0x8000, scoped, tag = 'output window, operand 0, single buffered']
    #allocation3 [shape = 's32[1]{0}', space=sflag, size = 0x4, scoped, tag = 'scoped memory for tpu_custom_call.1']
    %7 = vsyncpa [#allocation3], 0
    // Predicated region
    $region2: #{tpu_custom_call.1} parent=1 // pred_check
      _
    $region3: #{tpu_custom_call.1} parent=1 // pred_check_branch
      %9 = sbr.rel (0) target = $region5
    $region4: #{tpu_custom_call.1} parent=1 // pred_region
      _
    $region5: #{tpu_custom_call.1} parent=1 // pred_fallthru
      _
    // Predicated region
    $region6: #{tpu_custom_call.1} parent=1 // pred_check
      _
    $region7: #{tpu_custom_call.1} parent=1 // pred_check_branch
      %11 = sbr.rel (0) target = $region9
    $region8: #{tpu_custom_call.1} parent=1 // pred_region
      _
    $region9: #{tpu_custom_call.1} parent=1 // pred_fallthru
      _
    %v13 = vld [vmem:[%s0] sm:$0xff]
    %v14 = vld [vmem:[%s0 + $0x8] sm:$0xff]
    %v15 = vld [vmem:[%s0 + $0x10] sm:$0xff]
    %v16 = vld [vmem:[%s0 + $0x18] sm:$0xff]
    %v17 = vld [vmem:[%s0 + $0x20] sm:$0xff]
    %v18 = vld [vmem:[%s0 + $0x28] sm:$0xff]
    %v19 = vld [vmem:[%s0 + $0x30] sm:$0xff]
    %v20 = vld [vmem:[%s0 + $0x38] sm:$0xff]
    %v21 = vld [vmem:[%s0 + $0x40] sm:$0xff]
    %v22 = vld [vmem:[%s0 + $0x48] sm:$0xff]
    %v23 = vld [vmem:[%s0 + $0x50] sm:$0xff]
    %v24 = vld [vmem:[%s0 + $0x58] sm:$0xff]
    %v25 = vld [vmem:[%s0 + $0x60] sm:$0xff]
    %v26 = vld [vmem:[%s0 + $0x68] sm:$0xff]
    %v27 = vld [vmem:[%s0 + $0x70] sm:$0xff]
    %v28 = vld [vmem:[%s0 + $0x78] sm:$0xff]
    %v29 = vpack.c.bf16 %v14, %v13
    %v30 = vpack.c.bf16 %v16, %v15
    %v31 = vpack.c.bf16 %v18, %v17
    %v32 = vpack.c.bf16 %v20, %v19
    %v33 = vpack.c.bf16 %v22, %v21
    %v34 = vpack.c.bf16 %v24, %v23
    %v35 = vpack.c.bf16 %v26, %v25
    %v36 = vpack.c.bf16 %v28, %v27
    %v37 = vld [vmem:[%s1] sm:$0xf]
    %v38 = vld [vmem:[%s1 + $0x4] sm:$0xf]
    %v39 = vld [vmem:[%s1 + $0x8] sm:$0xf]
    %v40 = vld [vmem:[%s1 + $0xc] sm:$0xf]
    %v45 = vunpack.c.l.b16 %v37
    %v46 = vunpack.c.l.b16 %v38
    %v47 = vunpack.c.l.b16 %v39
    %v48 = vunpack.c.l.b16 %v40
    %v49 = vpack.c.b16 %v46, %v45
    %v50 = vpack.c.b16 %v48, %v47
    %vm53 = vcmask 261120
    %v55 = vsel %vm53, %v29, 0
    %v58 = vsel %vm53, %v30, 0
    %v61 = vsel %vm53, %v31, 0
    %v64 = vsel %vm53, %v32, 0
    %v67 = vsel %vm53, %v33, 0
    %v70 = vsel %vm53, %v34, 0
    %v73 = vsel %vm53, %v35, 0
    %v76 = vsel %vm53, %v36, 0
    %78 = vmatprep.subr.bf16.mxu0 0
    %79 = vmatpush1.bf16.msra.mxu0 %v49
    %80 = vmatprep.subr.bf16.mxu0 0
    %81 = vmatpush1.bf16.msra.mxu0 %v50
    %82 = vmatprep.subr.bf16.mxu0 0
    %83 = vmatpush1.bf16.msra.mxu0 0
    %84 = vmatprep.subr.bf16.mxu0 0
    %85 = vmatpush1.bf16.msra.mxu0 0
    %86 = vmatprep.subr.bf16.mxu0 0
    %87 = vmatpush1.bf16.msra.mxu0 0
    %88 = vmatprep.subr.bf16.mxu0 0
    %89 = vmatpush1.bf16.msra.mxu0 0
    %90 = vmatprep.subr.bf16.mxu0 0
    %91 = vmatpush1.bf16.msra.mxu0 0
    %92 = vmatprep.subr.bf16.mxu0 0
    %93 = vmatpush1.bf16.msra.mxu0 0
    %94 = vmatprep.subr.bf16.mxu0 0
    %95 = vmatpush1.bf16.msra.mxu0 0
    %96 = vmatprep.subr.bf16.mxu0 0
    %97 = vmatpush1.bf16.msra.mxu0 0
    %98 = vmatprep.subr.bf16.mxu0 0
    %99 = vmatpush1.bf16.msra.mxu0 0
    %100 = vmatprep.subr.bf16.mxu0 0
    %101 = vmatpush1.bf16.msra.mxu0 0
    %102 = vmatprep.subr.bf16.mxu0 0
    %103 = vmatpush1.bf16.msra.mxu0 0
    %104 = vmatprep.subr.bf16.mxu0 0
    %105 = vmatpush1.bf16.msra.mxu0 0
    %106 = vmatprep.subr.bf16.mxu0 0
    %107 = vmatpush1.bf16.msra.mxu0 0
    %108 = vmatprep.subr.bf16.mxu0 0
    %109 = vmatpush1.bf16.msra.mxu0 0
    %110 = vmatprep.mubr.bf16.mxu0 0
    %111 = vmatmul.mubr.bf16.gmra.mrb[0].mxu0 %v55
    %v112 = vpop.f32.mrb[0].mxu0
    %v113 = vadd.f32 0.0, %v112
    %v114 = vpop.f32.mrb[0].mxu0
    %v115 = vpop.f32.mrb[0].mxu0
    %v116 = vadd.f32 0.0, %v115
    %v117 = vpop.f32.mrb[0].mxu0
    %118 = vmatprep.mubr.bf16.mxu0 0
    %119 = vmatmul.mubr.bf16.gmra.mrb[0].mxu0 %v58
    %v120 = vpop.f32.mrb[0].mxu0
    %v121 = vadd.f32 0.0, %v120
    %v122 = vpop.f32.mrb[0].mxu0
    %v123 = vpop.f32.mrb[0].mxu0
    %v124 = vadd.f32 0.0, %v123
    %v125 = vpop.f32.mrb[0].mxu0
    %126 = vmatprep.mubr.bf16.mxu0 0
    %127 = vmatmul.mubr.bf16.gmra.mrb[0].mxu0 %v61
    %v128 = vpop.f32.mrb[0].mxu0
    %v129 = vadd.f32 0.0, %v128
    %v130 = vpop.f32.mrb[0].mxu0
    %v131 = vpop.f32.mrb[0].mxu0
    %v132 = vadd.f32 0.0, %v131
    %v133 = vpop.f32.mrb[0].mxu0
    %134 = vmatprep.mubr.bf16.mxu0 0
    %135 = vmatmul.mubr.bf16.gmra.mrb[0].mxu0 %v64
    %v136 = vpop.f32.mrb[0].mxu0
    %v137 = vadd.f32 0.0, %v136
    %v138 = vpop.f32.mrb[0].mxu0
    %v139 = vpop.f32.mrb[0].mxu0
    %v140 = vadd.f32 0.0, %v139
    %v141 = vpop.f32.mrb[0].mxu0
    %142 = vmatprep.mubr.bf16.mxu0 0
    %143 = vmatmul.mubr.bf16.gmra.mrb[0].mxu0 %v67
    %v144 = vpop.f32.mrb[0].mxu0
    %v145 = vadd.f32 0.0, %v144
    %v146 = vpop.f32.mrb[0].mxu0
    %v147 = vpop.f32.mrb[0].mxu0
    %v148 = vadd.f32 0.0, %v147
    %v149 = vpop.f32.mrb[0].mxu0
    %150 = vmatprep.mubr.bf16.mxu0 0
    %151 = vmatmul.mubr.bf16.gmra.mrb[0].mxu0 %v70
    %v152 = vpop.f32.mrb[0].mxu0
    %v153 = vadd.f32 0.0, %v152
    %v154 = vpop.f32.mrb[0].mxu0
    %v155 = vpop.f32.mrb[0].mxu0
    %v156 = vadd.f32 0.0, %v155
    %v157 = vpop.f32.mrb[0].mxu0
    %158 = vmatprep.mubr.bf16.mxu0 0
    %159 = vmatmul.mubr.bf16.gmra.mrb[0].mxu0 %v73
    %v160 = vpop.f32.mrb[0].mxu0
    %v161 = vadd.f32 0.0, %v160
    %v162 = vpop.f32.mrb[0].mxu0
    %v163 = vpop.f32.mrb[0].mxu0
    %v164 = vadd.f32 0.0, %v163
    %v165 = vpop.f32.mrb[0].mxu0
    %166 = vmatprep.mubr.bf16.mxu0 0
    %167 = vmatmul.mubr.bf16.gmra.mrb[0].mxu0 %v76
    %v168 = vpop.f32.mrb[0].mxu0
    %v169 = vadd.f32 0.0, %v168
    %v170 = vpop.f32.mrb[0].mxu0
    %v171 = vpop.f32.mrb[0].mxu0
    %v172 = vadd.f32 0.0, %v171
    %v173 = vpop.f32.mrb[0].mxu0
    %174 = vdwg.mxu0
    %v175 = vpack.c.bf16 %v116, %v113
    %v176 = vpack.c.bf16 %v124, %v121
    %v177 = vpack.c.bf16 %v132, %v129
    %v178 = vpack.c.bf16 %v140, %v137
    %v179 = vpack.c.bf16 %v148, %v145
    %v180 = vpack.c.bf16 %v156, %v153
    %v181 = vpack.c.bf16 %v164, %v161
    %v182 = vpack.c.bf16 %v172, %v169
    %v191 = vunpack.c.l.b16 %v175
    %v192 = vunpack.c.h.b16 %v175
    %v193 = vunpack.c.l.b16 %v176
    %v194 = vunpack.c.h.b16 %v176
    %v195 = vunpack.c.l.b16 %v177
    %v196 = vunpack.c.h.b16 %v177
    %v197 = vunpack.c.l.b16 %v178
    %v198 = vunpack.c.h.b16 %v178
    %v199 = vunpack.c.l.b16 %v179
    %v200 = vunpack.c.h.b16 %v179
    %v201 = vunpack.c.l.b16 %v180
    %v202 = vunpack.c.h.b16 %v180
    %v203 = vunpack.c.l.b16 %v181
    %v204 = vunpack.c.h.b16 %v181
    %v205 = vunpack.c.l.b16 %v182
    %v206 = vunpack.c.h.b16 %v182
    %v207 = vpack.c.b16 %v191, %v191
    %v208 = vpack.c.b16 %v192, %v192
    %v209 = vpack.c.b16 %v193, %v193
    %v210 = vpack.c.b16 %v194, %v194
    %v211 = vpack.c.b16 %v195, %v195
    %v212 = vpack.c.b16 %v196, %v196
    %v213 = vpack.c.b16 %v197, %v197
    %v214 = vpack.c.b16 %v198, %v198
    %v215 = vpack.c.b16 %v199, %v199
    %v216 = vpack.c.b16 %v200, %v200
    %v217 = vpack.c.b16 %v201, %v201
    %v218 = vpack.c.b16 %v202, %v202
    %v219 = vpack.c.b16 %v203, %v203
    %v220 = vpack.c.b16 %v204, %v204
    %v221 = vpack.c.b16 %v205, %v205
    %v222 = vpack.c.b16 %v206, %v206
    %239 = vst [vmem:[#allocation2] sm:$0xf] %v207
    %240 = vst [vmem:[#allocation2 + $0x4] sm:$0xf] %v208
    %241 = vst [vmem:[#allocation2 + $0x8] sm:$0xf] %v209
    %242 = vst [vmem:[#allocation2 + $0xc] sm:$0xf] %v210
    %243 = vst [vmem:[#allocation2 + $0x10] sm:$0xf] %v211
    %244 = vst [vmem:[#allocation2 + $0x14] sm:$0xf] %v212
    %245 = vst [vmem:[#allocation2 + $0x18] sm:$0xf] %v213
    %246 = vst [vmem:[#allocation2 + $0x1c] sm:$0xf] %v214
    %247 = vst [vmem:[#allocation2 + $0x20] sm:$0xf] %v215
    %248 = vst [vmem:[#allocation2 + $0x24] sm:$0xf] %v216
    %249 = vst [vmem:[#allocation2 + $0x28] sm:$0xf] %v217
    %250 = vst [vmem:[#allocation2 + $0x2c] sm:$0xf] %v218
    %251 = vst [vmem:[#allocation2 + $0x30] sm:$0xf] %v219
    %252 = vst [vmem:[#allocation2 + $0x34] sm:$0xf] %v220
    %253 = vst [vmem:[#allocation2 + $0x38] sm:$0xf] %v221
    %254 = vst [vmem:[#allocation2 + $0x3c] sm:$0xf] %v222
    // Predicated region
    $region10: #{tpu_custom_call.1} parent=1 // pred_check
      _
    $region11: #{tpu_custom_call.1} parent=1 // pred_check_branch
      %256 = sbr.rel (0) target = $region13
    $region12: #{tpu_custom_call.1} parent=1 // pred_region
      %s258 = ssub.s32 1024, 1024
      %259 = vsyncadd [#allocation3], %s258
      %s260 = sshll.u32 [#allocation2], 4
      %s261 = int_to_ptr.vmem [resolvable:$true] %s260
      %266 = dma.vmem_to_hbm [thread:$0]  %s261, 1024, %s2, [#allocation3], 64, 64, 4
    $region13: #{tpu_custom_call.1} parent=1 // pred_fallthru
      _
    // Predicated region
    $region14: #{tpu_custom_call.1} parent=1 // pred_check
      _
    $region15: #{tpu_custom_call.1} parent=1 // pred_check_branch
      %268 = sbr.rel (0) target = $region17
    $region16: #{tpu_custom_call.1} parent=1 // pred_region
      %269 = dma.done [#allocation3], 1024
    $region17: #{tpu_custom_call.1} parent=1 // pred_fallthru
      _
    %270 = vsyncpa [#allocation3], 1

// kernel: tpu_custom_call.1
$region0: #{tpu_custom_call.1}
  #allocation0 [shape = 'u32[]', space=smem, size = 0x4, offset = 0x4, fixed_abs, tag = 'smem constant byte address 0x4 - core index']
  #allocation1 [shape = 'u32[144,128]{1,0:T(1,128)}', space=vmem, size = 0x12000, scoped, tag = 'internal scratch']
  %s0 = inlined_call_operand.vmem [shape: f32[128,32], index: 0, kind: input, shape index: {}]
  %s1 = inlined_call_operand.vmem [shape: bf16[32,128], index: 1, kind: input, shape index: {}]
  %s2 = inlined_call_operand.hbm [shape: bf16[128,128], index: 2, kind: output, shape index: {}]
  %s3 = sld [smem:[#allocation0]]
  $region18: #{tpu_custom_call.1} parent=0
    _
  %s5 = ssub.s32 1, %s3
  %s6 = scalar_select 0, %s5, %s3
  $region1: #{tpu_custom_call.1} parent=0
    #allocation2 [shape = 'u8[32768]{0}', space=vmem, size = 0x8000, scoped, tag = 'output window, operand 0, single buffered']
    #allocation3 [shape = 's32[1]{0}', space=sflag, size = 0x4, scoped, tag = 'scoped memory for tpu_custom_call.1']
    %7 = vsyncpa [#allocation3], 0
    // Predicated region
    $region2: #{tpu_custom_call.1} parent=1 // pred_check
      _
    $region3: #{tpu_custom_call.1} parent=1 // pred_check_branch
      %9 = sbr.rel (0) target = $region5
    $region4: #{tpu_custom_call.1} parent=1 // pred_region
      _
    $region5: #{tpu_custom_call.1} parent=1 // pred_fallthru
      _
    // Predicated region
    $region6: #{tpu_custom_call.1} parent=1 // pred_check
      _
    $region7: #{tpu_custom_call.1} parent=1 // pred_check_branch
      %11 = sbr.rel (0) target = $region9
    $region8: #{tpu_custom_call.1} parent=1 // pred_region
      _
    $region9: #{tpu_custom_call.1} parent=1 // pred_fallthru
      _
    %v13 = vld [vmem:[%s0] sm:$0xff]
    %v14 = vld [vmem:[%s0 + $0x8] sm:$0xff]
    %v15 = vld [vmem:[%s0 + $0x10] sm:$0xff]
    %v16 = vld [vmem:[%s0 + $0x18] sm:$0xff]
    %v17 = vld [vmem:[%s0 + $0x20] sm:$0xff]
    %v18 = vld [vmem:[%s0 + $0x28] sm:$0xff]
    %v19 = vld [vmem:[%s0 + $0x30] sm:$0xff]
    %v20 = vld [vmem:[%s0 + $0x38] sm:$0xff]
    %v21 = vld [vmem:[%s0 + $0x40] sm:$0xff]
    %v22 = vld [vmem:[%s0 + $0x48] sm:$0xff]
    %v23 = vld [vmem:[%s0 + $0x50] sm:$0xff]
    %v24 = vld [vmem:[%s0 + $0x58] sm:$0xff]
    %v25 = vld [vmem:[%s0 + $0x60] sm:$0xff]
    %v26 = vld [vmem:[%s0 + $0x68] sm:$0xff]
    %v27 = vld [vmem:[%s0 + $0x70] sm:$0xff]
    %v28 = vld [vmem:[%s0 + $0x78] sm:$0xff]
    %v29 = vpack.c.bf16 %v14, %v13
    %v30 = vpack.c.bf16 %v16, %v15
    %v31 = vpack.c.bf16 %v18, %v17
    %v32 = vpack.c.bf16 %v20, %v19
    %v33 = vpack.c.bf16 %v22, %v21
    %v34 = vpack.c.bf16 %v24, %v23
    %v35 = vpack.c.bf16 %v26, %v25
    %v36 = vpack.c.bf16 %v28, %v27
    %v37 = vld [vmem:[%s1] sm:$0xf]
    %v38 = vld [vmem:[%s1 + $0x4] sm:$0xf]
    %v39 = vld [vmem:[%s1 + $0x8] sm:$0xf]
    %v40 = vld [vmem:[%s1 + $0xc] sm:$0xf]
    %v45 = vunpack.c.l.b16 %v37
    %v46 = vunpack.c.l.b16 %v38
    %v47 = vunpack.c.l.b16 %v39
    %v48 = vunpack.c.l.b16 %v40
    %v49 = vpack.c.b16 %v46, %v45
    %v50 = vpack.c.b16 %v48, %v47
    %vm53 = vcmask 261120
    %v55 = vsel %vm53, %v29, 0
    %v58 = vsel %vm53, %v30, 0
    %v61 = vsel %vm53, %v31, 0
    %v64 = vsel %vm53, %v32, 0
    %v67 = vsel %vm53, %v33, 0
    %v70 = vsel %vm53, %v34, 0
    %v73 = vsel %vm53, %v35, 0
    %v76 = vsel %vm53, %v36, 0
    %78 = vmatprep.subr.bf16.mxu0 0
    %79 = vmatpush1.bf16.msra.mxu0 %v49
    %80 = vmatprep.subr.bf16.mxu0 0
    %81 = vmatpush1.bf16.msra.mxu0 %v50
    %82 = vmatprep.subr.bf16.mxu0 0
    %83 = vmatpush1.bf16.msra.mxu0 0
    %84 = vmatprep.subr.bf16.mxu0 0
    %85 = vmatpush1.bf16.msra.mxu0 0
    %86 = vmatprep.subr.bf16.mxu0 0
    %87 = vmatpush1.bf16.msra.mxu0 0
    %88 = vmatprep.subr.bf16.mxu0 0
    %89 = vmatpush1.bf16.msra.mxu0 0
    %90 = vmatprep.subr.bf16.mxu0 0
    %91 = vmatpush1.bf16.msra.mxu0 0
    %92 = vmatprep.subr.bf16.mxu0 0
    %93 = vmatpush1.bf16.msra.mxu0 0
    %94 = vmatprep.subr.bf16.mxu0 0
    %95 = vmatpush1.bf16.msra.mxu0 0
    %96 = vmatprep.subr.bf16.mxu0 0
    %97 = vmatpush1.bf16.msra.mxu0 0
    %98 = vmatprep.subr.bf16.mxu0 0
    %99 = vmatpush1.bf16.msra.mxu0 0
    %100 = vmatprep.subr.bf16.mxu0 0
    %101 = vmatpush1.bf16.msra.mxu0 0
    %102 = vmatprep.subr.bf16.mxu0 0
    %103 = vmatpush1.bf16.msra.mxu0 0
    %104 = vmatprep.subr.bf16.mxu0 0
    %105 = vmatpush1.bf16.msra.mxu0 0
    %106 = vmatprep.subr.bf16.mxu0 0
    %107 = vmatpush1.bf16.msra.mxu0 0
    %108 = vmatprep.subr.bf16.mxu0 0
    %109 = vmatpush1.bf16.msra.mxu0 0
    %110 = vmatprep.mubr.bf16.mxu0 0
    %111 = vmatmul.mubr.bf16.gmra.mrb[0].mxu0 %v55
    %v112 = vpop.f32.mrb[0].mxu0
    %v113 = vadd.f32 0.0, %v112
    %v114 = vpop.f32.mrb[0].mxu0
    %v115 = vpop.f32.mrb[0].mxu0
    %v116 = vadd.f32 0.0, %v115
    %v117 = vpop.f32.mrb[0].mxu0
    %118 = vmatprep.mubr.bf16.mxu0 0
    %119 = vmatmul.mubr.bf16.gmra.mrb[0].mxu0 %v58
    %v120 = vpop.f32.mrb[0].mxu0
    %v121 = vadd.f32 0.0, %v120
    %v122 = vpop.f32.mrb[0].mxu0
    %v123 = vpop.f32.mrb[0].mxu0
    %v124 = vadd.f32 0.0, %v123
    %v125 = vpop.f32.mrb[0].mxu0
    %126 = vmatprep.mubr.bf16.mxu0 0
    %127 = vmatmul.mubr.bf16.gmra.mrb[0].mxu0 %v61
    %v128 = vpop.f32.mrb[0].mxu0
    %v129 = vadd.f32 0.0, %v128
    %v130 = vpop.f32.mrb[0].mxu0
    %v131 = vpop.f32.mrb[0].mxu0
    %v132 = vadd.f32 0.0, %v131
    %v133 = vpop.f32.mrb[0].mxu0
    %134 = vmatprep.mubr.bf16.mxu0 0
    %135 = vmatmul.mubr.bf16.gmra.mrb[0].mxu0 %v64
    %v136 = vpop.f32.mrb[0].mxu0
    %v137 = vadd.f32 0.0, %v136
    %v138 = vpop.f32.mrb[0].mxu0
    %v139 = vpop.f32.mrb[0].mxu0
    %v140 = vadd.f32 0.0, %v139
    %v141 = vpop.f32.mrb[0].mxu0
    %142 = vmatprep.mubr.bf16.mxu0 0
    %143 = vmatmul.mubr.bf16.gmra.mrb[0].mxu0 %v67
    %v144 = vpop.f32.mrb[0].mxu0
    %v145 = vadd.f32 0.0, %v144
    %v146 = vpop.f32.mrb[0].mxu0
    %v147 = vpop.f32.mrb[0].mxu0
    %v148 = vadd.f32 0.0, %v147
    %v149 = vpop.f32.mrb[0].mxu0
    %150 = vmatprep.mubr.bf16.mxu0 0
    %151 = vmatmul.mubr.bf16.gmra.mrb[0].mxu0 %v70
    %v152 = vpop.f32.mrb[0].mxu0
    %v153 = vadd.f32 0.0, %v152
    %v154 = vpop.f32.mrb[0].mxu0
    %v155 = vpop.f32.mrb[0].mxu0
    %v156 = vadd.f32 0.0, %v155
    %v157 = vpop.f32.mrb[0].mxu0
    %158 = vmatprep.mubr.bf16.mxu0 0
    %159 = vmatmul.mubr.bf16.gmra.mrb[0].mxu0 %v73
    %v160 = vpop.f32.mrb[0].mxu0
    %v161 = vadd.f32 0.0, %v160
    %v162 = vpop.f32.mrb[0].mxu0
    %v163 = vpop.f32.mrb[0].mxu0
    %v164 = vadd.f32 0.0, %v163
    %v165 = vpop.f32.mrb[0].mxu0
    %166 = vmatprep.mubr.bf16.mxu0 0
    %167 = vmatmul.mubr.bf16.gmra.mrb[0].mxu0 %v76
    %v168 = vpop.f32.mrb[0].mxu0
    %v169 = vadd.f32 0.0, %v168
    %v170 = vpop.f32.mrb[0].mxu0
    %v171 = vpop.f32.mrb[0].mxu0
    %v172 = vadd.f32 0.0, %v171
    %v173 = vpop.f32.mrb[0].mxu0
    %174 = vdwg.mxu0
    %v175 = vpack.c.bf16 %v116, %v113
    %v176 = vpack.c.bf16 %v124, %v121
    %v177 = vpack.c.bf16 %v132, %v129
    %v178 = vpack.c.bf16 %v140, %v137
    %v179 = vpack.c.bf16 %v148, %v145
    %v180 = vpack.c.bf16 %v156, %v153
    %v181 = vpack.c.bf16 %v164, %v161
    %v182 = vpack.c.bf16 %v172, %v169
    %v191 = vunpack.c.l.b16 %v175
    %v192 = vunpack.c.h.b16 %v175
    %v193 = vunpack.c.l.b16 %v176
    %v194 = vunpack.c.h.b16 %v176
    %v195 = vunpack.c.l.b16 %v177
    %v196 = vunpack.c.h.b16 %v177
    %v197 = vunpack.c.l.b16 %v178
    %v198 = vunpack.c.h.b16 %v178
    %v199 = vunpack.c.l.b16 %v179
    %v200 = vunpack.c.h.b16 %v179
    %v201 = vunpack.c.l.b16 %v180
    %v202 = vunpack.c.h.b16 %v180
    %v203 = vunpack.c.l.b16 %v181
    %v204 = vunpack.c.h.b16 %v181
    %v205 = vunpack.c.l.b16 %v182
    %v206 = vunpack.c.h.b16 %v182
    %v207 = vpack.c.b16 %v191, %v191
    %v208 = vpack.c.b16 %v192, %v192
    %v209 = vpack.c.b16 %v193, %v193
    %v210 = vpack.c.b16 %v194, %v194
    %v211 = vpack.c.b16 %v195, %v195
    %v212 = vpack.c.b16 %v196, %v196
    %v213 = vpack.c.b16 %v197, %v197
    %v214 = vpack.c.b16 %v198, %v198
    %v215 = vpack.c.b16 %v199, %v199
    %v216 = vpack.c.b16 %v200, %v200
    %v217 = vpack.c.b16 %v201, %v201
    %v218 = vpack.c.b16 %v202, %v202
    %v219 = vpack.c.b16 %v203, %v203
    %v220 = vpack.c.b16 %v204, %v204
    %v221 = vpack.c.b16 %v205, %v205
    %v222 = vpack.c.b16 %v206, %v206
    %239 = vst [vmem:[#allocation2] sm:$0xf] %v207
    %240 = vst [vmem:[#allocation2 + $0x4] sm:$0xf] %v208
    %241 = vst [vmem:[#allocation2 + $0x8] sm:$0xf] %v209
    %242 = vst [vmem:[#allocation2 + $0xc] sm:$0xf] %v210
    %243 = vst [vmem:[#allocation2 + $0x10] sm:$0xf] %v211
    %244 = vst [vmem:[#allocation2 + $0x14] sm:$0xf] %v212
    %245 = vst [vmem:[#allocation2 + $0x18] sm:$0xf] %v213
    %246 = vst [vmem:[#allocation2 + $0x1c] sm:$0xf] %v214
    %247 = vst [vmem:[#allocation2 + $0x20] sm:$0xf] %v215
    %248 = vst [vmem:[#allocation2 + $0x24] sm:$0xf] %v216
    %249 = vst [vmem:[#allocation2 + $0x28] sm:$0xf] %v217
    %250 = vst [vmem:[#allocation2 + $0x2c] sm:$0xf] %v218
    %251 = vst [vmem:[#allocation2 + $0x30] sm:$0xf] %v219
    %252 = vst [vmem:[#allocation2 + $0x34] sm:$0xf] %v220
    %253 = vst [vmem:[#allocation2 + $0x38] sm:$0xf] %v221
    %254 = vst [vmem:[#allocation2 + $0x3c] sm:$0xf] %v222
    // Predicated region
    $region10: #{tpu_custom_call.1} parent=1 // pred_check
      _
    $region11: #{tpu_custom_call.1} parent=1 // pred_check_branch
      %256 = sbr.rel (0) target = $region13
    $region12: #{tpu_custom_call.1} parent=1 // pred_region
      %s258 = ssub.s32 1024, 1024
      %259 = vsyncadd [#allocation3], %s258
      %s260 = sshll.u32 [#allocation2], 4
      %s261 = int_to_ptr.vmem [resolvable:$true] %s260
      %266 = dma.vmem_to_hbm [thread:$0]  %s261, 1024, %s2, [#allocation3], 64, 64, 4
    $region13: #{tpu_custom_call.1} parent=1 // pred_fallthru
      _
    // Predicated region
    $region14: #{tpu_custom_call.1} parent=1 // pred_check
      _
    $region15: #{tpu_custom_call.1} parent=1 // pred_check_branch
      %268 = sbr.rel (0) target = $region17
    $region16: #{tpu_custom_call.1} parent=1 // pred_region
      %269 = dma.done [#allocation3], 1024
    $region17: #{tpu_custom_call.1} parent=1 // pred_fallthru
      _
    %270 = vsyncpa [#allocation3], 1

</llo_original>
